<compile_context>
chip_gen: v5e
topology: v5e:2x2
jax: 0.10.0
libtpu: 0.0.40
codegen_flags: <defaults>
</compile_context>

<pallas_src>
import functools

import jax
import jax.numpy as jnp
from jax.experimental import pallas as pl
from jax.experimental.pallas import tpu as pltpu

DCR_TOP = 0.5  # cfg.DCR.TOP


def _round_up(x, m):
    return (x + m - 1) // m * m


def _dcr_fused_kernel(lim_ref, boxdel_ref, cls_ref, blob_ref, score_ref):
    """bbox_pred + clip_boxes + foreground class-max on one lane tile.

    lim_ref    : VMEM (2, 1)       f32  [[im_w - 1], [im_h - 1]]
    boxdel_ref : VMEM (8, TILE_N)  f32  rows = x1, y1, x2, y2, dx, dy, dw, dh
    cls_ref    : VMEM (TILE_N, C)  f32  class probabilities (col 0 = background)
    blob_ref   : VMEM (4, TILE_N)  f32  rows = px1, py1, px2, py2 (clipped)
    score_ref  : VMEM (TILE_N, 1)  f32  max foreground probability per ROI
    """
    # ---- bbox transform inverse + clip, vectorized over (x, y) pairs ----
    xy1 = boxdel_ref[0:2, :]            # (x1, y1)
    xy2 = boxdel_ref[2:4, :]            # (x2, y2)
    dxy = boxdel_ref[4:6, :]            # (dx, dy)
    dwh = boxdel_ref[6:8, :]            # (dw, dh)

    wh = xy2 - xy1 + 1.0                # (widths, heights)
    ctr = xy1 + 0.5 * (wh - 1.0)        # (ctr_x, ctr_y)

    pred_ctr = dxy * wh + ctr           # (pred_ctr_x, pred_ctr_y)
    pred_wh = jnp.exp(dwh) * wh         # single (2, N) EUP exp
    half = 0.5 * (pred_wh - 1.0)

    lim = lim_ref[...]                  # (2, 1) -> lane-broadcast against (2, TILE_N)
    blob_ref[0:2, :] = jnp.clip(pred_ctr - half, 0.0, lim)   # (px1, py1)
    blob_ref[2:4, :] = jnp.clip(pred_ctr + half, 0.0, lim)   # (px2, py2)

    # ---- fused per-ROI max over foreground classes (native (N, C) layout) ----
    cls = cls_ref[...]                                           # (TILE_N, C)
    col = jax.lax.broadcasted_iota(jnp.int32, cls.shape, 1)      # lane index
    fg = jnp.where(col >= 1, cls, jnp.float32(-jnp.inf))         # mask background
    score_ref[...] = jnp.max(fg, axis=1, keepdims=True)          # (TILE_N, 1)


@functools.partial(jax.jit, static_argnames=("top",))
def dcr_proposal_layer(rois, cls_prob, bbox_pred_tensor, im_info, top=DCR_TOP):
    """JAX/Pallas equivalent of _DCRProposalLayer.forward.

    rois             : (1, N, 5) float32  [batch_ind, x1, y1, x2, y2]
    cls_prob         : (N, C)    float32  class probabilities (col 0 = bg)
    bbox_pred_tensor : (N, >=8)  float32  per-class deltas; cols 4:8 are used
    im_info          : (1, 3)    float32  [height, width, scale]

    Returns (blob[keep_index], keep_index) with blob rows = [0, x1, y1, x2, y2].
    """
    n = rois.shape[1]
    c = cls_prob.shape[1]
    # NOTE: the original code computes int(rois.shape[0] * top) which, with a
    # batched (1, N, 5) rois, would always be 0; the intended semantics (from
    # the upstream DCR layer) is the top fraction of the N proposals.
    num_keep = int(n * top)

    rois_xyxy = rois[0, :, 1:].astype(jnp.float32)             # (N, 4)
    deltas = bbox_pred_tensor[:, 4:8].astype(jnp.float32)      # (N, 4) class-1 deltas

    # Pack to coordinate-major (8, N): rows x1,y1,x2,y2,dx,dy,dw,dh — one full
    # 8-sublane tile (the transpose of this small (N, 8) tensor is cheap
    # layout glue; the big cls tensor stays in its native (N, C) layout).
    boxdel = jnp.concatenate([rois_xyxy, deltas], axis=1).T    # (8, N)

    # ---- tile sizing: derive step count first, bound padding waste to <128
    # dead columns per tile, and keep >=2 steps when splittable so the
    # "parallel" grid axis can shard across v7x's two TensorCores. ----
    n128 = _round_up(n, 128)
    cap = 8192                                 # fused-tile cap: ~17 MiB VMEM double-buffered
    steps = (n128 + cap - 1) // cap
    if steps == 1 and n128 >= 256:
        steps = 2
    tile_n = _round_up((n128 + steps - 1) // steps, 128)
    n_pad = steps * tile_n

    boxdel = jnp.pad(boxdel, ((0, 0), (0, n_pad - n)))                     # (8, N_pad)
    cls_pad = jnp.pad(cls_prob.astype(jnp.float32), ((0, n_pad - n), (0, 0)))  # (N_pad, C)

    # Clip limits as a (2, 1) column: [im_w - 1, im_h - 1] (x rows, y rows).
    lims = jnp.stack([im_info[0, 1] - 1.0, im_info[0, 0] - 1.0]) \
              .reshape(2, 1).astype(jnp.float32)

    blob4_t, scores_col = pl.pallas_call(
        _dcr_fused_kernel,
        grid_spec=pltpu.PrefetchScalarGridSpec(
            num_scalar_prefetch=0,
            grid=(steps,),
            in_specs=[
                pl.BlockSpec((2, 1), lambda i: (0, 0)),            # clip limits
                pl.BlockSpec((8, tile_n), lambda i: (0, i)),       # packed rois+deltas
                pl.BlockSpec((tile_n, c), lambda i: (i, 0)),       # cls_prob, native layout
            ],
            out_specs=[
                pl.BlockSpec((4, tile_n), lambda i: (0, i)),       # lane-dense proposals
                pl.BlockSpec((tile_n, 1), lambda i: (i, 0)),       # max fg score per ROI
            ],
        ),
        out_shape=(
            jax.ShapeDtypeStruct((4, n_pad), jnp.float32),
            jax.ShapeDtypeStruct((n_pad, 1), jnp.float32),
        ),
        compiler_params=pltpu.CompilerParams(
            dimension_semantics=("parallel",),
            vmem_limit_bytes=32 * 1024 * 1024,
        ),
    )(lims, boxdel, cls_pad)

    # Top-fraction selection: lax.top_k instead of a full argsort (cheaper on
    # TPU; ties resolve lower-index-first, matching stable argsort of -scores).
    # TODO(synk): top-k / sort selection has no clean Pallas TPU primitive;
    # kept as plain-XLA glue.
    max_scores = scores_col[:n, 0]                                # (N,)
    _, keep_index = jax.lax.top_k(max_scores, num_keep)
    keep_index = keep_index.astype(jnp.int32)

    # Gather the kept columns BEFORE transposing (4 x num_keep relayout only).
    kept = blob4_t[:, keep_index].T                               # (num_keep, 4)
    blob = jnp.concatenate(
        [jnp.zeros((num_keep, 1), jnp.float32), kept], axis=1)    # (num_keep, 5)

    return blob, keep_index


def _reference(rois, cls_prob, bbox_pred_tensor, im_info, top=DCR_TOP):
    """Pure-jnp reference mirroring the numpy forward (for sanity checking)."""
    n = rois.shape[1]
    num_keep = int(n * top)
    boxes = rois[0, :, 1:]
    deltas = bbox_pred_tensor[:, 4:8]
    im = im_info[0]
    scores = jnp.max(cls_prob[:, 1:], axis=1)
    keep = jnp.argsort(-scores)[:num_keep]

    widths = boxes[:, 2] - boxes[:, 0] + 1.0
    heights = boxes[:, 3] - boxes[:, 1] + 1.0
    ctr_x = boxes[:, 0] + 0.5 * (widths - 1.0)
    ctr_y = boxes[:, 1] + 0.5 * (heights - 1.0)
    dx, dy, dw, dh = deltas[:, 0], deltas[:, 1], deltas[:, 2], deltas[:, 3]
    pcx = dx * widths + ctr_x
    pcy = dy * heights + ctr_y
    pw = jnp.exp(dw) * widths
    ph = jnp.exp(dh) * heights
    x1 = jnp.clip(pcx - 0.5 * (pw - 1.0), 0.0, im[1] - 1.0)
    y1 = jnp.clip(pcy - 0.5 * (ph - 1.0), 0.0, im[0] - 1.0)
    x2 = jnp.clip(pcx + 0.5 * (pw - 1.0), 0.0, im[1] - 1.0)
    y2 = jnp.clip(pcy + 0.5 * (ph - 1.0), 0.0, im[0] - 1.0)
    blob = jnp.stack([jnp.zeros_like(x1), x1, y1, x2, y2], axis=1)
    return blob[keep, :], keep


if __name__ == "__main__":
    key = jax.random.PRNGKey(0)
    k1, k2, k3, k4 = jax.random.split(key, 4)

    N = 16           # number of ROIs
    C = 4            # number of classes (col 0 = background)
    IM_H, IM_W = 64.0, 64.0

    # ROIs: (1, N, 5) -> [batch_ind, x1, y1, x2, y2], x2>x1, y2>y1
    xy1 = jax.random.uniform(k1, (N, 2), minval=0.0, maxval=40.0)
    wh = jax.random.uniform(k2, (N, 2), minval=4.0, maxval=20.0)
    xy2 = xy1 + wh
    rois = jnp.concatenate(
        [jnp.zeros((N, 1), jnp.float32), xy1, xy2], axis=1)[None, ...]

    # class probabilities (N, C) and per-class bbox deltas (N, 4*C_box >= 8)
    cls_logits = jax.random.normal(k3, (N, C), dtype=jnp.float32)
    cls_prob = jax.nn.softmax(cls_logits, axis=-1)
    bbox_pred_tensor = 0.1 * jax.random.normal(k4, (N, 8), dtype=jnp.float32)

    im_info = jnp.array([[IM_H, IM_W, 1.0]], dtype=jnp.float32)

    blob, keep_index = dcr_proposal_layer(rois, cls_prob, bbox_pred_tensor, im_info)
    jax.block_until_ready((blob, keep_index))

    blob_ref, keep_ref = _reference(rois, cls_prob, bbox_pred_tensor, im_info)
    assert blob.shape == (int(N * DCR_TOP), 5) and keep_index.shape == (int(N * DCR_TOP),)
    assert jnp.allclose(blob, blob_ref, atol=1e-4, rtol=1e-4)
    assert jnp.array_equal(keep_index, keep_ref)

    print("KERNEL_OK")
</pallas_src>

<mosaic_0001>
module attributes {stable_mosaic.version = 11 : i64} {
  func.func @_dcr_fused_kernel(%arg0: i32, %arg1: memref<2x1xf32, #tpu.memory_space<vmem>>, %arg2: memref<8x128xf32, #tpu.memory_space<vmem>>, %arg3: memref<128x4xf32, #tpu.memory_space<vmem>>, %arg4: memref<4x128xf32, #tpu.memory_space<vmem>>, %arg5: memref<128x1xf32, #tpu.memory_space<vmem>>) attributes {dimension_semantics = [#tpu.dimension_semantics<parallel>], iteration_bounds = array<i64: 1>, scalar_prefetch = 0 : i64, scratch_operands = 0 : i64, tpu.core_type = #tpu.core_type<tc>, window_params = [{pipeline_mode = #tpu.pipeline_mode<synchronous>, transform_indices = @transform_0, window_bounds = array<i64: 2, 1>}, {transform_indices = @transform_1, window_bounds = array<i64: 8, 128>}, {transform_indices = @transform_2, window_bounds = array<i64: 128, 4>}, {transform_indices = @transform_3, window_bounds = array<i64: 4, 128>}, {transform_indices = @transform_4, window_bounds = array<i64: 128, 1>}]} {
    %c0 = arith.constant 0 : index
    %c0_0 = arith.constant 0 : index
    %0 = vector.load %arg2[%c0, %c0_0] : memref<8x128xf32, #tpu.memory_space<vmem>>, vector<2x128xf32>
    %c2 = arith.constant 2 : index
    %c0_1 = arith.constant 0 : index
    %1 = vector.load %arg2[%c2, %c0_1] : memref<8x128xf32, #tpu.memory_space<vmem>>, vector<2x128xf32>
    %c4 = arith.constant 4 : index
    %c0_2 = arith.constant 0 : index
    %2 = vector.load %arg2[%c4, %c0_2] : memref<8x128xf32, #tpu.memory_space<vmem>>, vector<2x128xf32>
    %c6 = arith.constant 6 : index
    %c0_3 = arith.constant 0 : index
    %3 = vector.load %arg2[%c6, %c0_3] : memref<8x128xf32, #tpu.memory_space<vmem>>, vector<2x128xf32>
    %4 = arith.subf %1, %0 : vector<2x128xf32>
    %cst = arith.constant 1.000000e+00 : f32
    %5 = vector.broadcast %cst : f32 to vector<2x128xf32>
    %6 = arith.addf %4, %5 : vector<2x128xf32>
    %cst_4 = arith.constant 1.000000e+00 : f32
    %7 = vector.broadcast %cst_4 : f32 to vector<2x128xf32>
    %8 = arith.subf %6, %7 : vector<2x128xf32>
    %cst_5 = arith.constant 5.000000e-01 : f32
    %9 = vector.broadcast %cst_5 : f32 to vector<2x128xf32>
    %10 = arith.mulf %9, %8 : vector<2x128xf32>
    %11 = arith.addf %0, %10 : vector<2x128xf32>
    %12 = arith.mulf %2, %6 : vector<2x128xf32>
    %13 = arith.addf %12, %11 : vector<2x128xf32>
    %14 = math.exp %3 : vector<2x128xf32>
    %15 = arith.mulf %14, %6 : vector<2x128xf32>
    %cst_6 = arith.constant 1.000000e+00 : f32
    %16 = vector.broadcast %cst_6 : f32 to vector<2x128xf32>
    %17 = arith.subf %15, %16 : vector<2x128xf32>
    %cst_7 = arith.constant 5.000000e-01 : f32
    %18 = vector.broadcast %cst_7 : f32 to vector<2x128xf32>
    %19 = arith.mulf %18, %17 : vector<2x128xf32>
    %c0_8 = arith.constant 0 : index
    %c0_9 = arith.constant 0 : index
    %20 = vector.load %arg1[%c0_8, %c0_9] : memref<2x1xf32, #tpu.memory_space<vmem>>, vector<2x1xf32>
    %21 = arith.subf %13, %19 : vector<2x128xf32>
    %cst_10 = arith.constant 0.000000e+00 : f32
    %22 = vector.broadcast %cst_10 : f32 to vector<2x128xf32>
    %23 = arith.maximumf %22, %21 : vector<2x128xf32>
    %24 = vector.broadcast %20 : vector<2x1xf32> to vector<2x128xf32>
    %25 = arith.minimumf %24, %23 : vector<2x128xf32>
    %c0_11 = arith.constant 0 : index
    %c0_12 = arith.constant 0 : index
    %26 = vector.load %arg4[%c0_11, %c0_12] : memref<4x128xf32, #tpu.memory_space<vmem>>, vector<2x128xf32>
    tpu.vector_store %arg4[%c0_11, %c0_12], %25 {strides = array<i32>} : memref<4x128xf32, #tpu.memory_space<vmem>>, vector<2x128xf32>,
    %27 = arith.addf %13, %19 : vector<2x128xf32>
    %cst_13 = arith.constant 0.000000e+00 : f32
    %28 = vector.broadcast %cst_13 : f32 to vector<2x128xf32>
    %29 = arith.maximumf %28, %27 : vector<2x128xf32>
    %30 = vector.broadcast %20 : vector<2x1xf32> to vector<2x128xf32>
    %31 = arith.minimumf %30, %29 : vector<2x128xf32>
    %c2_14 = arith.constant 2 : index
    %c0_15 = arith.constant 0 : index
    %32 = vector.load %arg4[%c2_14, %c0_15] : memref<4x128xf32, #tpu.memory_space<vmem>>, vector<2x128xf32>
    tpu.vector_store %arg4[%c2_14, %c0_15], %31 {strides = array<i32>} : memref<4x128xf32, #tpu.memory_space<vmem>>, vector<2x128xf32>,
    %c0_16 = arith.constant 0 : index
    %c0_17 = arith.constant 0 : index
    %33 = vector.load %arg3[%c0_16, %c0_17] : memref<128x4xf32, #tpu.memory_space<vmem>>, vector<128x4xf32>
    %34 = tpu.iota {dimensions = array<i32: 1>} : vector<128x4xi32>
    %c1_i32 = arith.constant 1 : i32
    %35 = vector.broadcast %c1_i32 : i32 to vector<128x4xi32>
    %36 = arith.cmpi sge, %34, %35 : vector<128x4xi32>
    %cst_18 = arith.constant 0xFF800000 : f32
    %37 = vector.broadcast %cst_18 : f32 to vector<128x4xf32>
    %38 = arith.select %36, %33, %37 : vector<128x4xi1>, vector<128x4xf32>
    %cst_19 = arith.constant dense<0xFF800000> : vector<128xf32>
    %39 = vector.multi_reduction <maximumf>, %38, %cst_19 [1] : vector<128x4xf32> to vector<128xf32>
    %40 = vector.shape_cast %39 : vector<128xf32> to vector<128x1xf32>
    %c0_20 = arith.constant 0 : index
    %c0_21 = arith.constant 0 : index
    %41 = vector.load %arg5[%c0_20, %c0_21] : memref<128x1xf32, #tpu.memory_space<vmem>>, vector<128x1xf32>
    tpu.vector_store %arg5[%c0_20, %c0_21], %40 {strides = array<i32>} : memref<128x1xf32, #tpu.memory_space<vmem>>, vector<128x1xf32>,
    return
  }
  func.func @transform_0(%arg0: i32) -> (i32, i32) {
    %c0_i32 = arith.constant 0 : i32
    %c0_i32_0 = arith.constant 0 : i32
    %c0_i32_1 = arith.constant 0 : i32
    return %c0_i32, %c0_i32_0 : i32, i32
  }
  func.func @transform_1(%arg0: i32) -> (i32, i32) {
    %c0_i32 = arith.constant 0 : i32
    %c0_i32_0 = arith.constant 0 : i32
    return %c0_i32, %arg0 : i32, i32
  }
  func.func @transform_2(%arg0: i32) -> (i32, i32) {
    %c0_i32 = arith.constant 0 : i32
    %c0_i32_0 = arith.constant 0 : i32
    return %arg0, %c0_i32 : i32, i32
  }
  func.func @transform_3(%arg0: i32) -> (i32, i32) {
    %c0_i32 = arith.constant 0 : i32
    %c0_i32_0 = arith.constant 0 : i32
    return %c0_i32, %arg0 : i32, i32
  }
  func.func @transform_4(%arg0: i32) -> (i32, i32) {
    %c0_i32 = arith.constant 0 : i32
    %c0_i32_0 = arith.constant 0 : i32
    return %arg0, %c0_i32 : i32, i32
  }
}

</mosaic_0001>

<llo_original>
// kernel: dcr_proposal_layer.1
$region0: #{dcr_proposal_layer.1}
  #allocation0 [shape = 'u32[]', space=smem, size = 0x4, offset = 0x4, fixed_abs, tag = 'smem constant byte address 0x4 - core index']
  #allocation1 [shape = 'u32[72,128]{1,0:T(1,128)}', space=vmem, size = 0x9000, scoped, tag = 'internal scratch']
  %s0 = inlined_call_operand.vmem [shape: f32[2,1], index: 0, kind: input, shape index: {}]
  %s1 = inlined_call_operand.vmem [shape: f32[8,128], index: 1, kind: input, shape index: {}]
  %s2 = inlined_call_operand.vmem [shape: f32[128,4], index: 2, kind: input, shape index: {}]
  %s3 = inlined_call_operand.vmem [shape: f32[4,128], index: 3, kind: output, shape index: {0}]
  %s4 = inlined_call_operand.vmem [shape: f32[128,1], index: 4, kind: output, shape index: {1}]
  %5 = xla_tuple %s3, %s4
  %s6 = sld [smem:[#allocation0]]
  $region30: #{dcr_proposal_layer.1} parent=0
    _
  %s8 = ssub.s32 1, %s6
  %s9 = scalar_select 0, %s8, %s6
  // Predicated region
  $region2: #{dcr_proposal_layer.1} parent=0 // pred_check
    _
  $region3: #{dcr_proposal_layer.1} parent=0 // pred_check_branch
    %11 = sbr.rel (0) target = $region5
  $region4: #{dcr_proposal_layer.1} parent=0 // pred_region
    _
  $region5: #{dcr_proposal_layer.1} parent=0 // pred_fallthru
    _
  // Predicated region
  $region6: #{dcr_proposal_layer.1} parent=0 // pred_check
    _
  $region7: #{dcr_proposal_layer.1} parent=0 // pred_check_branch
    %13 = sbr.rel (0) target = $region9
  $region8: #{dcr_proposal_layer.1} parent=0 // pred_region
    _
  $region9: #{dcr_proposal_layer.1} parent=0 // pred_fallthru
    _
  // Predicated region
  $region10: #{dcr_proposal_layer.1} parent=0 // pred_check
    _
  $region11: #{dcr_proposal_layer.1} parent=0 // pred_check_branch
    %15 = sbr.rel (0) target = $region13
  $region12: #{dcr_proposal_layer.1} parent=0 // pred_region
    _
  $region13: #{dcr_proposal_layer.1} parent=0 // pred_fallthru
    _
  %v16 = vld [vmem:[%s1] sm:$0x3]
  %v17 = vld [vmem:[%s1 + $0x2] sm:$0x3]
  %v18 = vld [vmem:[%s1 + $0x4] sm:$0x3]
  %v19 = vld [vmem:[%s1 + $0x6] sm:$0x3]
  %v20 = vsub.f32 %v17, %v16
  %v21 = vadd.f32 %v20, 1.0
  %v22 = vsub.f32 %v21, 1.0
  %v23 = vmul.f32 %v22, 0.5
  %v24 = vadd.f32 %v16, %v23
  %v25 = vmul.f32 %v18, %v21
  %v26 = vadd.f32 %v25, %v24
  %v27 = vmul.f32 %v19, 1.442695
  %v28 = vpow.pop %v27
  %v29 = vmul.f32 %v28, %v21
  %v30 = vsub.f32 %v29, 1.0
  %v31 = vmul.f32 %v30, 0.5
  %v32 = vld [vmem:[%s0] sm:$0x3]
  %v33 = vsub.f32 %v26, %v31
  %v34 = vmax.f32 %v33, 0.0
  %36 = vset.pattern.permute.xlu0 0
  %37 = vperm.xlu0 %36, %v32
  %v38 = vpop.permute.xlu0 %37
  %v40 = vmin.f32 %v38, %v34
  %41 = vst [vmem:[%s3] sm:$0x3] %v40
  %v42 = vadd.f32 %v26, %v31
  %v43 = vmax.f32 %v42, 0.0
  %v44 = vmin.f32 %v38, %v43
  %45 = vst [vmem:[%s3 + $0x2] sm:$0x3] %v44
  %v46 = vld [vmem:[%s2] sm:$0xff]
  %v47 = vld [vmem:[%s2 + $0x8] sm:$0xff]
  %v48 = vld [vmem:[%s2 + $0x10] sm:$0xff]
  %v49 = vld [vmem:[%s2 + $0x18] sm:$0xff]
  %v50 = vld [vmem:[%s2 + $0x20] sm:$0xff]
  %v51 = vld [vmem:[%s2 + $0x28] sm:$0xff]
  %v52 = vld [vmem:[%s2 + $0x30] sm:$0xff]
  %v53 = vld [vmem:[%s2 + $0x38] sm:$0xff]
  %v54 = vld [vmem:[%s2 + $0x40] sm:$0xff]
  %v55 = vld [vmem:[%s2 + $0x48] sm:$0xff]
  %v56 = vld [vmem:[%s2 + $0x50] sm:$0xff]
  %v57 = vld [vmem:[%s2 + $0x58] sm:$0xff]
  %v58 = vld [vmem:[%s2 + $0x60] sm:$0xff]
  %v59 = vld [vmem:[%s2 + $0x68] sm:$0xff]
  %v60 = vld [vmem:[%s2 + $0x70] sm:$0xff]
  %v61 = vld [vmem:[%s2 + $0x78] sm:$0xff]
  %v62 = vlaneseq
  %v63 = vand.u32 %v62, 127
  %vm64 = vcmp.ge.s32.totalorder %v63, 1
  %v65 = vsel %vm64, %v46, -inf
  %v66 = vsel %vm64, %v47, -inf
  %v67 = vsel %vm64, %v48, -inf
  %v68 = vsel %vm64, %v49, -inf
  %v69 = vsel %vm64, %v50, -inf
  %v70 = vsel %vm64, %v51, -inf
  %v71 = vsel %vm64, %v52, -inf
  %v72 = vsel %vm64, %v53, -inf
  %v73 = vsel %vm64, %v54, -inf
  %v74 = vsel %vm64, %v55, -inf
  %v75 = vsel %vm64, %v56, -inf
  %v76 = vsel %vm64, %v57, -inf
  %v77 = vsel %vm64, %v58, -inf
  %v78 = vsel %vm64, %v59, -inf
  %v79 = vsel %vm64, %v60, -inf
  %v80 = vsel %vm64, %v61, -inf
  %vm81 = vcmask 31744
  %v82 = vsel %vm81, %v65, -inf
  %83 = vmax.xlane.f32.xlu0 %v82
  %v84 = vpop.xlane.xlu0 %83
  %v85 = vsel %vm81, %v66, -inf
  %86 = vmax.xlane.f32.xlu0 %v85
  %v87 = vpop.xlane.xlu0 %86
  %v88 = vsel %vm81, %v67, -inf
  %89 = vmax.xlane.f32.xlu0 %v88
  %v90 = vpop.xlane.xlu0 %89
  %v91 = vsel %vm81, %v68, -inf
  %92 = vmax.xlane.f32.xlu0 %v91
  %v93 = vpop.xlane.xlu0 %92
  %v94 = vsel %vm81, %v69, -inf
  %95 = vmax.xlane.f32.xlu0 %v94
  %v96 = vpop.xlane.xlu0 %95
  %v97 = vsel %vm81, %v70, -inf
  %98 = vmax.xlane.f32.xlu0 %v97
  %v99 = vpop.xlane.xlu0 %98
  %v100 = vsel %vm81, %v71, -inf
  %101 = vmax.xlane.f32.xlu0 %v100
  %v102 = vpop.xlane.xlu0 %101
  %v103 = vsel %vm81, %v72, -inf
  %104 = vmax.xlane.f32.xlu0 %v103
  %v105 = vpop.xlane.xlu0 %104
  %v106 = vsel %vm81, %v73, -inf
  %107 = vmax.xlane.f32.xlu0 %v106
  %v108 = vpop.xlane.xlu0 %107
  %v109 = vsel %vm81, %v74, -inf
  %110 = vmax.xlane.f32.xlu0 %v109
  %v111 = vpop.xlane.xlu0 %110
  %v112 = vsel %vm81, %v75, -inf
  %113 = vmax.xlane.f32.xlu0 %v112
  %v114 = vpop.xlane.xlu0 %113
  %v115 = vsel %vm81, %v76, -inf
  %116 = vmax.xlane.f32.xlu0 %v115
  %v117 = vpop.xlane.xlu0 %116
  %v118 = vsel %vm81, %v77, -inf
  %119 = vmax.xlane.f32.xlu0 %v118
  %v120 = vpop.xlane.xlu0 %119
  %v121 = vsel %vm81, %v78, -inf
  %122 = vmax.xlane.f32.xlu0 %v121
  %v123 = vpop.xlane.xlu0 %122
  %v124 = vsel %vm81, %v79, -inf
  %125 = vmax.xlane.f32.xlu0 %v124
  %v126 = vpop.xlane.xlu0 %125
  %v127 = vsel %vm81, %v80, -inf
  %128 = vmax.xlane.f32.xlu0 %v127
  %v129 = vpop.xlane.xlu0 %128
  %vm130 = vcmask 7168
  %131 = vst.msk [vmem:[%s4] sm:$0xff] %vm130, %v84
  %132 = vst.msk [vmem:[%s4 + $0x8] sm:$0xff] %vm130, %v87
  %133 = vst.msk [vmem:[%s4 + $0x10] sm:$0xff] %vm130, %v90
  %134 = vst.msk [vmem:[%s4 + $0x18] sm:$0xff] %vm130, %v93
  %135 = vst.msk [vmem:[%s4 + $0x20] sm:$0xff] %vm130, %v96
  %136 = vst.msk [vmem:[%s4 + $0x28] sm:$0xff] %vm130, %v99
  %137 = vst.msk [vmem:[%s4 + $0x30] sm:$0xff] %vm130, %v102
  %138 = vst.msk [vmem:[%s4 + $0x38] sm:$0xff] %vm130, %v105
  %139 = vst.msk [vmem:[%s4 + $0x40] sm:$0xff] %vm130, %v108
  %140 = vst.msk [vmem:[%s4 + $0x48] sm:$0xff] %vm130, %v111
  %141 = vst.msk [vmem:[%s4 + $0x50] sm:$0xff] %vm130, %v114
  %142 = vst.msk [vmem:[%s4 + $0x58] sm:$0xff] %vm130, %v117
  %143 = vst.msk [vmem:[%s4 + $0x60] sm:$0xff] %vm130, %v120
  %144 = vst.msk [vmem:[%s4 + $0x68] sm:$0xff] %vm130, %v123
  %145 = vst.msk [vmem:[%s4 + $0x70] sm:$0xff] %vm130, %v126
  %146 = vst.msk [vmem:[%s4 + $0x78] sm:$0xff] %vm130, %v129
  // Predicated region
  $region14: #{dcr_proposal_layer.1} parent=0 // pred_check
    _
  $region15: #{dcr_proposal_layer.1} parent=0 // pred_check_branch
    %148 = sbr.rel (0) target = $region17
  $region16: #{dcr_proposal_layer.1} parent=0 // pred_region
    _
  $region17: #{dcr_proposal_layer.1} parent=0 // pred_fallthru
    _
  // Predicated region
  $region18: #{dcr_proposal_layer.1} parent=0 // pred_check
    _
  $region19: #{dcr_proposal_layer.1} parent=0 // pred_check_branch
    %150 = sbr.rel (0) target = $region21
  $region20: #{dcr_proposal_layer.1} parent=0 // pred_region
    _
  $region21: #{dcr_proposal_layer.1} parent=0 // pred_fallthru
    _
  // Predicated region
  $region22: #{dcr_proposal_layer.1} parent=0 // pred_check
    _
  $region23: #{dcr_proposal_layer.1} parent=0 // pred_check_branch
    %152 = sbr.rel (0) target = $region25
  $region24: #{dcr_proposal_layer.1} parent=0 // pred_region
    _
  $region25: #{dcr_proposal_layer.1} parent=0 // pred_fallthru
    _
  // Predicated region
  $region26: #{dcr_proposal_layer.1} parent=0 // pred_check
    _
  $region27: #{dcr_proposal_layer.1} parent=0 // pred_check_branch
    %154 = sbr.rel (0) target = $region29
  $region28: #{dcr_proposal_layer.1} parent=0 // pred_region
    _
  $region29: #{dcr_proposal_layer.1} parent=0 // pred_fallthru
    _

</llo_original>
